<compile_context>
chip_gen: v5e
topology: v5e:2x2
jax: 0.10.0
libtpu: 0.0.40
codegen_flags: <defaults>
</compile_context>

<pallas_src>
import functools

import numpy as np
import jax
import jax.numpy as jnp
from jax.experimental import pallas as pl
from jax.experimental.pallas import tpu as pltpu

LKERN_CHANNEL = 8
VKERN_CHANNEL = 16
LANE = 128


def _round_up(n, m):
    return ((n + m - 1) // m) * m


# ----------------------------------------------------------------------------
# Pallas kernel: fused (lkern + vkern) 3x3 conv + bias for one batch element
# ----------------------------------------------------------------------------

def _convadapt_kernel(xp_ref, w_ref, b_ref, o_ref, *, H, W):
    """xp_ref: (H+2, W+2, Cip)  spatially + channel padded NHWC tile (VMEM)
    w_ref : (9, Cip, Cop)       folded dense weight, tap-major (t = dy*3 + dx)
    b_ref : (1, Cop)            folded bias
    o_ref : (H*W, Cop)          output rows (lane-dense)
    """
    cip = xp_ref.shape[-1]
    cop = o_ref.shape[-1]
    acc = jnp.zeros((H * W, cop), jnp.float32)
    # in-kernel im2col: 9 shifted VMEM windows, matmul-accumulated on the MXU
    for t in range(9):
        dy, dx = t // 3, t % 3
        win = xp_ref[dy:dy + H, dx:dx + W, :].reshape(H * W, cip)
        acc = acc + jnp.dot(win, w_ref[t], preferred_element_type=jnp.float32)
    o_ref[...] = acc + b_ref[...]


def convadapt_apply(params, x):
    """ConvAdapt forward.  x: (B, H, W, Cin) NHWC f32 -> (B, H, W, Cout)."""
    B, H, W, cin = x.shape
    w9, bias = params['w9'], params['b']
    cip, cop = w9.shape[1], w9.shape[2]
    cout = params['cout']
    assert cin == params['cin']

    # single cheap pad: +1 spatial halo each side, channel pad Cin -> Cip
    xp = jnp.pad(x, ((0, 0), (1, 1), (1, 1), (0, cip - cin)))
    Hp, Wp = H + 2, W + 2

    out = pl.pallas_call(
        functools.partial(_convadapt_kernel, H=H, W=W),
        grid=(B,),
        in_specs=[
            pl.BlockSpec((pl.Squeezed(), Hp, Wp, cip), lambda b: (b, 0, 0, 0)),
            pl.BlockSpec((9, cip, cop), lambda b: (0, 0, 0)),
            pl.BlockSpec((1, cop), lambda b: (0, 0)),
        ],
        out_specs=pl.BlockSpec((pl.Squeezed(), H * W, cop),
                               lambda b: (b, 0, 0)),
        out_shape=jax.ShapeDtypeStruct((B, H * W, cop), jnp.float32),
        compiler_params=pltpu.CompilerParams(
            dimension_semantics=("parallel",)),
    )(xp, w9, bias)

    out = out.reshape(B, H, W, cop)
    return out[..., :cout] if cout != cop else out


# ----------------------------------------------------------------------------
# Parameter construction (mirrors nn.Conv2d grouped weights) + exact folding
# ----------------------------------------------------------------------------

def _densify_grouped(blocks):
    """(G, Co_g, Ci_g, kh, kw) grouped weight -> block-diagonal dense
    (Cout, Cin, kh, kw) in PyTorch layout (exact)."""
    G, cog, cig, kh, kw = blocks.shape
    w = np.zeros((G * cog, G * cig, kh, kw), np.float32)
    b = np.asarray(blocks)
    for g in range(G):
        w[g * cog:(g + 1) * cog, g * cig:(g + 1) * cig] = b[g]
    return w


def init_convadapt(key, in_channels, out_channels, p, scale=0.05):
    kl, kv, kbl, kbv = jax.random.split(key, 4)
    gl = p // LKERN_CHANNEL          # lkern: 3x3, groups = p/8
    gv = p // VKERN_CHANNEL          # vkern: 1x1, groups = p/16
    wl_g = scale * jax.random.normal(
        kl, (gl, out_channels // gl, in_channels // gl, 3, 3), jnp.float32)
    wv_g = scale * jax.random.normal(
        kv, (gv, out_channels // gv, in_channels // gv, 1, 1), jnp.float32)
    bl = scale * jax.random.normal(kbl, (out_channels,), jnp.float32)
    bv = scale * jax.random.normal(kbv, (out_channels,), jnp.float32)

    # densify grouped weights (exact), fold vkern into the 3x3 centre tap (exact)
    wl = _densify_grouped(np.asarray(wl_g))            # (Cout, Cin, 3, 3)
    wv = _densify_grouped(np.asarray(wv_g))            # (Cout, Cin, 1, 1)
    w = wl.copy()
    w[:, :, 1, 1] += wv[:, :, 0, 0]
    b = np.asarray(bl) + np.asarray(bv)

    # lane-pad channels to multiples of 128 (zero rows/cols: exact)
    cip = _round_up(in_channels, LANE)
    cop = _round_up(out_channels, LANE)
    wp = np.zeros((cop, cip, 3, 3), np.float32)
    wp[:out_channels, :in_channels] = w
    bp = np.zeros((cop,), np.float32)
    bp[:out_channels] = b

    # kernel layout: (tap = dy*3 + dx, Cin_p, Cout_p)
    w9 = np.transpose(wp, (2, 3, 1, 0)).reshape(9, cip, cop)

    return {
        'w9': jnp.asarray(w9),
        'b': jnp.asarray(bp).reshape(1, cop),
        'cin': in_channels,
        'cout': out_channels,
        # raw grouped parameters, kept only for the pure-JAX reference check
        'wl_g': wl_g, 'wv_g': wv_g, 'bl': bl, 'bv': bv,
    }


# ----------------------------------------------------------------------------
# Pure-JAX reference (true grouped convs, PyTorch semantics) for verification
# ----------------------------------------------------------------------------

def _grouped_conv_ref(x, blocks, bias, pad):
    G, cog, cig, kh, kw = blocks.shape
    w_hwio = jnp.transpose(blocks, (3, 4, 2, 0, 1)).reshape(kh, kw, cig, G * cog)
    y = jax.lax.conv_general_dilated(
        x, w_hwio, window_strides=(1, 1), padding=((pad, pad), (pad, pad)),
        dimension_numbers=('NHWC', 'HWIO', 'NHWC'),
        feature_group_count=G, precision=jax.lax.Precision.HIGHEST)
    return y + bias.reshape(1, 1, 1, -1)


def convadapt_reference(params, x):
    """ConvAdapt.forward: lkern(x) + vkern(x)."""
    return (_grouped_conv_ref(x, params['wl_g'], params['bl'], 1)
            + _grouped_conv_ref(x, params['wv_g'], params['bv'], 0))


# ----------------------------------------------------------------------------
if __name__ == "__main__":
    # ConvAdapt(in_channels=64, out_channels=64, p=64) on a PyTorch-NCHW input
    # of shape (2, 64, 8, 8)  ->  NHWC (2, 8, 8, 64) here (matching its use on
    # the 64-channel stage of the surrounding ResNet trunk).
    in_channels = out_channels = p = 64
    B, H, W = 2, 8, 8

    key = jax.random.PRNGKey(0)
    kparam, kx = jax.random.split(key)
    params = init_convadapt(kparam, in_channels, out_channels, p)
    x = jax.random.normal(kx, (B, H, W, in_channels), dtype=jnp.float32)

    fwd = jax.jit(lambda inp: convadapt_apply(params, inp))
    y = fwd(x)
    jax.block_until_ready(y)
    assert y.shape == (B, H, W, out_channels), y.shape

    # correctness check against the true grouped-conv reference (all folds are
    # exact, so only matmul accumulation-order noise is expected)
    y_ref = convadapt_reference(params, x)
    np.testing.assert_allclose(np.asarray(y), np.asarray(y_ref),
                               atol=2e-3, rtol=2e-3)
    print("KERNEL_OK")
</pallas_src>

<mosaic_0001>
module attributes {stable_mosaic.version = 11 : i64} {
  func.func @_convadapt_kernel(%arg0: i32, %arg1: memref<1x10x10x128xf32, #tpu.memory_space<vmem>>, %arg2: memref<9x128x128xf32, #tpu.memory_space<vmem>>, %arg3: memref<1x128xf32, #tpu.memory_space<vmem>>, %arg4: memref<1x64x128xf32, #tpu.memory_space<vmem>>) attributes {dimension_semantics = [#tpu.dimension_semantics<parallel>], iteration_bounds = array<i64: 2>, scalar_prefetch = 0 : i64, scratch_operands = 0 : i64, tpu.core_type = #tpu.core_type<tc>, window_params = [{transform_indices = @transform_0, window_bounds = array<i64: 1, 10, 10, 128>}, {pipeline_mode = #tpu.pipeline_mode<synchronous>, transform_indices = @transform_1, window_bounds = array<i64: 9, 128, 128>}, {pipeline_mode = #tpu.pipeline_mode<synchronous>, transform_indices = @transform_2, window_bounds = array<i64: 1, 128>}, {transform_indices = @transform_3, window_bounds = array<i64: 1, 64, 128>}]} {
    %cst = arith.constant 0.000000e+00 : f32
    %0 = vector.broadcast %cst : f32 to vector<64x128xf32>
    %c0 = arith.constant 0 : index
    %c0_0 = arith.constant 0 : index
    %c0_1 = arith.constant 0 : index
    %c0_2 = arith.constant 0 : index
    %1 = vector.load %arg1[%c0, %c0_0, %c0_1, %c0_2] : memref<1x10x10x128xf32, #tpu.memory_space<vmem>>, vector<1x8x8x128xf32>
    %2 = vector.shape_cast %1 : vector<1x8x8x128xf32> to vector<8x8x128xf32>
    %3 = vector.shape_cast %2 : vector<8x8x128xf32> to vector<64x128xf32>
    %c0_3 = arith.constant 0 : index
    %c0_4 = arith.constant 0 : index
    %c0_5 = arith.constant 0 : index
    %4 = vector.load %arg2[%c0_3, %c0_4, %c0_5] : memref<9x128x128xf32, #tpu.memory_space<vmem>>, vector<1x128x128xf32>
    %5 = vector.shape_cast %4 : vector<1x128x128xf32> to vector<128x128xf32>
    %cst_6 = arith.constant dense<0.000000e+00> : vector<64x128xf32>
    %6 = tpu.matmul %3, %5, %cst_6 {dimension_numbers = #tpu.dot_dimension_numbers<[1], [0], [0], [1], [0, 0, 1, 1], [], []>} : vector<64x128xf32>, vector<128x128xf32>, vector<64x128xf32> -> vector<64x128xf32>
    %7 = arith.addf %0, %6 : vector<64x128xf32>
    %c0_7 = arith.constant 0 : index
    %c0_8 = arith.constant 0 : index
    %c1 = arith.constant 1 : index
    %c0_9 = arith.constant 0 : index
    %8 = vector.load %arg1[%c0_7, %c0_8, %c1, %c0_9] : memref<1x10x10x128xf32, #tpu.memory_space<vmem>>, vector<1x8x8x128xf32>
    %9 = vector.shape_cast %8 : vector<1x8x8x128xf32> to vector<8x8x128xf32>
    %10 = vector.shape_cast %9 : vector<8x8x128xf32> to vector<64x128xf32>
    %c1_10 = arith.constant 1 : index
    %c0_11 = arith.constant 0 : index
    %c0_12 = arith.constant 0 : index
    %11 = vector.load %arg2[%c1_10, %c0_11, %c0_12] : memref<9x128x128xf32, #tpu.memory_space<vmem>>, vector<1x128x128xf32>
    %12 = vector.shape_cast %11 : vector<1x128x128xf32> to vector<128x128xf32>
    %cst_13 = arith.constant dense<0.000000e+00> : vector<64x128xf32>
    %13 = tpu.matmul %10, %12, %cst_13 {dimension_numbers = #tpu.dot_dimension_numbers<[1], [0], [0], [1], [0, 0, 1, 1], [], []>} : vector<64x128xf32>, vector<128x128xf32>, vector<64x128xf32> -> vector<64x128xf32>
    %14 = arith.addf %7, %13 : vector<64x128xf32>
    %c0_14 = arith.constant 0 : index
    %c0_15 = arith.constant 0 : index
    %c2 = arith.constant 2 : index
    %c0_16 = arith.constant 0 : index
    %15 = vector.load %arg1[%c0_14, %c0_15, %c2, %c0_16] : memref<1x10x10x128xf32, #tpu.memory_space<vmem>>, vector<1x8x8x128xf32>
    %16 = vector.shape_cast %15 : vector<1x8x8x128xf32> to vector<8x8x128xf32>
    %17 = vector.shape_cast %16 : vector<8x8x128xf32> to vector<64x128xf32>
    %c2_17 = arith.constant 2 : index
    %c0_18 = arith.constant 0 : index
    %c0_19 = arith.constant 0 : index
    %18 = vector.load %arg2[%c2_17, %c0_18, %c0_19] : memref<9x128x128xf32, #tpu.memory_space<vmem>>, vector<1x128x128xf32>
    %19 = vector.shape_cast %18 : vector<1x128x128xf32> to vector<128x128xf32>
    %cst_20 = arith.constant dense<0.000000e+00> : vector<64x128xf32>
    %20 = tpu.matmul %17, %19, %cst_20 {dimension_numbers = #tpu.dot_dimension_numbers<[1], [0], [0], [1], [0, 0, 1, 1], [], []>} : vector<64x128xf32>, vector<128x128xf32>, vector<64x128xf32> -> vector<64x128xf32>
    %21 = arith.addf %14, %20 : vector<64x128xf32>
    %c0_21 = arith.constant 0 : index
    %c1_22 = arith.constant 1 : index
    %c0_23 = arith.constant 0 : index
    %c0_24 = arith.constant 0 : index
    %22 = vector.load %arg1[%c0_21, %c1_22, %c0_23, %c0_24] : memref<1x10x10x128xf32, #tpu.memory_space<vmem>>, vector<1x8x8x128xf32>
    %23 = vector.shape_cast %22 : vector<1x8x8x128xf32> to vector<8x8x128xf32>
    %24 = vector.shape_cast %23 : vector<8x8x128xf32> to vector<64x128xf32>
    %c3 = arith.constant 3 : index
    %c0_25 = arith.constant 0 : index
    %c0_26 = arith.constant 0 : index
    %25 = vector.load %arg2[%c3, %c0_25, %c0_26] : memref<9x128x128xf32, #tpu.memory_space<vmem>>, vector<1x128x128xf32>
    %26 = vector.shape_cast %25 : vector<1x128x128xf32> to vector<128x128xf32>
    %cst_27 = arith.constant dense<0.000000e+00> : vector<64x128xf32>
    %27 = tpu.matmul %24, %26, %cst_27 {dimension_numbers = #tpu.dot_dimension_numbers<[1], [0], [0], [1], [0, 0, 1, 1], [], []>} : vector<64x128xf32>, vector<128x128xf32>, vector<64x128xf32> -> vector<64x128xf32>
    %28 = arith.addf %21, %27 : vector<64x128xf32>
    %c0_28 = arith.constant 0 : index
    %c1_29 = arith.constant 1 : index
    %c1_30 = arith.constant 1 : index
    %c0_31 = arith.constant 0 : index
    %29 = vector.load %arg1[%c0_28, %c1_29, %c1_30, %c0_31] : memref<1x10x10x128xf32, #tpu.memory_space<vmem>>, vector<1x8x8x128xf32>
    %30 = vector.shape_cast %29 : vector<1x8x8x128xf32> to vector<8x8x128xf32>
    %31 = vector.shape_cast %30 : vector<8x8x128xf32> to vector<64x128xf32>
    %c4 = arith.constant 4 : index
    %c0_32 = arith.constant 0 : index
    %c0_33 = arith.constant 0 : index
    %32 = vector.load %arg2[%c4, %c0_32, %c0_33] : memref<9x128x128xf32, #tpu.memory_space<vmem>>, vector<1x128x128xf32>
    %33 = vector.shape_cast %32 : vector<1x128x128xf32> to vector<128x128xf32>
    %cst_34 = arith.constant dense<0.000000e+00> : vector<64x128xf32>
    %34 = tpu.matmul %31, %33, %cst_34 {dimension_numbers = #tpu.dot_dimension_numbers<[1], [0], [0], [1], [0, 0, 1, 1], [], []>} : vector<64x128xf32>, vector<128x128xf32>, vector<64x128xf32> -> vector<64x128xf32>
    %35 = arith.addf %28, %34 : vector<64x128xf32>
    %c0_35 = arith.constant 0 : index
    %c1_36 = arith.constant 1 : index
    %c2_37 = arith.constant 2 : index
    %c0_38 = arith.constant 0 : index
    %36 = vector.load %arg1[%c0_35, %c1_36, %c2_37, %c0_38] : memref<1x10x10x128xf32, #tpu.memory_space<vmem>>, vector<1x8x8x128xf32>
    %37 = vector.shape_cast %36 : vector<1x8x8x128xf32> to vector<8x8x128xf32>
    %38 = vector.shape_cast %37 : vector<8x8x128xf32> to vector<64x128xf32>
    %c5 = arith.constant 5 : index
    %c0_39 = arith.constant 0 : index
    %c0_40 = arith.constant 0 : index
    %39 = vector.load %arg2[%c5, %c0_39, %c0_40] : memref<9x128x128xf32, #tpu.memory_space<vmem>>, vector<1x128x128xf32>
    %40 = vector.shape_cast %39 : vector<1x128x128xf32> to vector<128x128xf32>
    %cst_41 = arith.constant dense<0.000000e+00> : vector<64x128xf32>
    %41 = tpu.matmul %38, %40, %cst_41 {dimension_numbers = #tpu.dot_dimension_numbers<[1], [0], [0], [1], [0, 0, 1, 1], [], []>} : vector<64x128xf32>, vector<128x128xf32>, vector<64x128xf32> -> vector<64x128xf32>
    %42 = arith.addf %35, %41 : vector<64x128xf32>
    %c0_42 = arith.constant 0 : index
    %c2_43 = arith.constant 2 : index
    %c0_44 = arith.constant 0 : index
    %c0_45 = arith.constant 0 : index
    %43 = vector.load %arg1[%c0_42, %c2_43, %c0_44, %c0_45] : memref<1x10x10x128xf32, #tpu.memory_space<vmem>>, vector<1x8x8x128xf32>
    %44 = vector.shape_cast %43 : vector<1x8x8x128xf32> to vector<8x8x128xf32>
    %45 = vector.shape_cast %44 : vector<8x8x128xf32> to vector<64x128xf32>
    %c6 = arith.constant 6 : index
    %c0_46 = arith.constant 0 : index
    %c0_47 = arith.constant 0 : index
    %46 = vector.load %arg2[%c6, %c0_46, %c0_47] : memref<9x128x128xf32, #tpu.memory_space<vmem>>, vector<1x128x128xf32>
    %47 = vector.shape_cast %46 : vector<1x128x128xf32> to vector<128x128xf32>
    %cst_48 = arith.constant dense<0.000000e+00> : vector<64x128xf32>
    %48 = tpu.matmul %45, %47, %cst_48 {dimension_numbers = #tpu.dot_dimension_numbers<[1], [0], [0], [1], [0, 0, 1, 1], [], []>} : vector<64x128xf32>, vector<128x128xf32>, vector<64x128xf32> -> vector<64x128xf32>
    %49 = arith.addf %42, %48 : vector<64x128xf32>
    %c0_49 = arith.constant 0 : index
    %c2_50 = arith.constant 2 : index
    %c1_51 = arith.constant 1 : index
    %c0_52 = arith.constant 0 : index
    %50 = vector.load %arg1[%c0_49, %c2_50, %c1_51, %c0_52] : memref<1x10x10x128xf32, #tpu.memory_space<vmem>>, vector<1x8x8x128xf32>
    %51 = vector.shape_cast %50 : vector<1x8x8x128xf32> to vector<8x8x128xf32>
    %52 = vector.shape_cast %51 : vector<8x8x128xf32> to vector<64x128xf32>
    %c7 = arith.constant 7 : index
    %c0_53 = arith.constant 0 : index
    %c0_54 = arith.constant 0 : index
    %53 = vector.load %arg2[%c7, %c0_53, %c0_54] : memref<9x128x128xf32, #tpu.memory_space<vmem>>, vector<1x128x128xf32>
    %54 = vector.shape_cast %53 : vector<1x128x128xf32> to vector<128x128xf32>
    %cst_55 = arith.constant dense<0.000000e+00> : vector<64x128xf32>
    %55 = tpu.matmul %52, %54, %cst_55 {dimension_numbers = #tpu.dot_dimension_numbers<[1], [0], [0], [1], [0, 0, 1, 1], [], []>} : vector<64x128xf32>, vector<128x128xf32>, vector<64x128xf32> -> vector<64x128xf32>
    %56 = arith.addf %49, %55 : vector<64x128xf32>
    %c0_56 = arith.constant 0 : index
    %c2_57 = arith.constant 2 : index
    %c2_58 = arith.constant 2 : index
    %c0_59 = arith.constant 0 : index
    %57 = vector.load %arg1[%c0_56, %c2_57, %c2_58, %c0_59] : memref<1x10x10x128xf32, #tpu.memory_space<vmem>>, vector<1x8x8x128xf32>
    %58 = vector.shape_cast %57 : vector<1x8x8x128xf32> to vector<8x8x128xf32>
    %59 = vector.shape_cast %58 : vector<8x8x128xf32> to vector<64x128xf32>
    %c8 = arith.constant 8 : index
    %c0_60 = arith.constant 0 : index
    %c0_61 = arith.constant 0 : index
    %60 = vector.load %arg2[%c8, %c0_60, %c0_61] : memref<9x128x128xf32, #tpu.memory_space<vmem>>, vector<1x128x128xf32>
    %61 = vector.shape_cast %60 : vector<1x128x128xf32> to vector<128x128xf32>
    %cst_62 = arith.constant dense<0.000000e+00> : vector<64x128xf32>
    %62 = tpu.matmul %59, %61, %cst_62 {dimension_numbers = #tpu.dot_dimension_numbers<[1], [0], [0], [1], [0, 0, 1, 1], [], []>} : vector<64x128xf32>, vector<128x128xf32>, vector<64x128xf32> -> vector<64x128xf32>
    %63 = arith.addf %56, %62 : vector<64x128xf32>
    %c0_63 = arith.constant 0 : index
    %c0_64 = arith.constant 0 : index
    %64 = vector.load %arg3[%c0_63, %c0_64] : memref<1x128xf32, #tpu.memory_space<vmem>>, vector<1x128xf32>
    %65 = vector.broadcast %64 : vector<1x128xf32> to vector<64x128xf32>
    %66 = arith.addf %63, %65 : vector<64x128xf32>
    %c0_65 = arith.constant 0 : index
    %c0_66 = arith.constant 0 : index
    %c0_67 = arith.constant 0 : index
    %67 = vector.load %arg4[%c0_65, %c0_66, %c0_67] : memref<1x64x128xf32, #tpu.memory_space<vmem>>, vector<1x64x128xf32>
    %68 = vector.shape_cast %67 : vector<1x64x128xf32> to vector<64x128xf32>
    %69 = vector.shape_cast %66 : vector<64x128xf32> to vector<1x64x128xf32>
    tpu.vector_store %arg4[%c0_65, %c0_66, %c0_67], %69 {strides = array<i32>} : memref<1x64x128xf32, #tpu.memory_space<vmem>>, vector<1x64x128xf32>,
    return
  }
  func.func @transform_0(%arg0: i32) -> (i32, i32, i32, i32) {
    %c0_i32 = arith.constant 0 : i32
    %c0_i32_0 = arith.constant 0 : i32
    %c0_i32_1 = arith.constant 0 : i32
    %c0_i32_2 = arith.constant 0 : i32
    return %arg0, %c0_i32, %c0_i32_0, %c0_i32_1 : i32, i32, i32, i32
  }
  func.func @transform_1(%arg0: i32) -> (i32, i32, i32) {
    %c0_i32 = arith.constant 0 : i32
    %c0_i32_0 = arith.constant 0 : i32
    %c0_i32_1 = arith.constant 0 : i32
    %c0_i32_2 = arith.constant 0 : i32
    return %c0_i32, %c0_i32_0, %c0_i32_1 : i32, i32, i32
  }
  func.func @transform_2(%arg0: i32) -> (i32, i32) {
    %c0_i32 = arith.constant 0 : i32
    %c0_i32_0 = arith.constant 0 : i32
    %c0_i32_1 = arith.constant 0 : i32
    return %c0_i32, %c0_i32_0 : i32, i32
  }
  func.func @transform_3(%arg0: i32) -> (i32, i32, i32) {
    %c0_i32 = arith.constant 0 : i32
    %c0_i32_0 = arith.constant 0 : i32
    %c0_i32_1 = arith.constant 0 : i32
    return %arg0, %c0_i32, %c0_i32_0 : i32, i32, i32
  }
}

</mosaic_0001>

<llo_original>
// kernel: _lambda_.1
$region0: #{_lambda_.1}
  #allocation0 [shape = 'u32[]', space=smem, size = 0x4, offset = 0x4, fixed_abs, tag = 'smem constant byte address 0x4 - core index']
  #allocation1 [shape = 'u32[72,128]{1,0:T(1,128)}', space=vmem, size = 0x9000, scoped, tag = 'internal scratch']
  %s0 = inlined_call_operand.vmem [shape: f32[2,10,10,128], index: 0, kind: input, shape index: {}]
  %s1 = inlined_call_operand.hbm [shape: f32[9,128,128], index: 1, kind: input, shape index: {}]
  %s2 = inlined_call_operand.vmem [shape: f32[1,128], index: 2, kind: input, shape index: {}]
  %s3 = inlined_call_operand.hbm [shape: f32[2,64,128], index: 3, kind: output, shape index: {}]
  %s4 = sld [smem:[#allocation0]]
  $region49: #{_lambda_.1} parent=0
    _
  %s6 = ssub.s32 1, %s4
  %s7 = scalar_select 0, %s6, %s4
  $region1: #{_lambda_.1} parent=0
    #allocation2 [shape = 'u8[589824]{0}', space=vmem, size = 0x90000, scoped, tag = 'input window, operand 1, single buffered']
    #allocation3 [shape = 's32[2]{0}', space=sflag, size = 0x8, scoped, tag = 'scoped memory for _lambda_.1']
    #allocation4 [shape = 's32[2]{0}', space=sflag, size = 0x8, scoped, tag = 'scoped memory for _lambda_.1']
    #allocation5 [shape = 'u8[65536]{0}', space=vmem, size = 0x10000, scoped, tag = 'output window, operand 0']
    %8 = vsyncpa [#allocation3], 0
    %9 = vsyncpa [#allocation4], 0
    %s10 = scalar_lea.sflag [#allocation4], 1
    %11 = vsyncpa %s10, 0
    loop: start=0, step=1, limit=4
    $region2: #{_lambda_.1} parent=1 // loop_pre_header
      _
    $region3: #{_lambda_.1} parent=1 // loop_header
      %s13 = sphi 0, %s17
      %p14 = scmp.ge.s32.totalorder %s13, 4
      %s23 = sphi 0, %s25
      %s26 = sphi 0, %s23
      %s27 = sphi 0, %s26
      %s43 = sphi 0, %s27
      %s47 = sphi 0, %s47
      %s49 = sphi 0, %s47
      %s50 = sphi 0, %s49
      %s64 = sphi 0, %s50
      %s68 = sphi 0, %s68
      %s70 = sphi 0, %s68
      %s71 = sphi 0, %s70
      %s85 = sphi 0, %s71
      %s91 = sphi 0, %s93
      %s94 = sphi 0, %s91
      %s95 = sphi 0, %s94
      %s111 = sphi 0, %s95
    $region4: #{_lambda_.1} parent=1 // loop_header_branch
      %16 = sbr.rel (%p14) target = $region8
    $region5: #{_lambda_.1} parent=1 // loop_body
      %s18 = ssub.s32 %s13, 1
      %s19 = ssub.s32 %s13, 2
      %s20 = sadd.s32 %s13, 1
      %s21 = ssub.s32 %s13, %s20
      %p22 = scmp.eq.s32.totalorder %s21, 0
      %s24 = sadd.s32 %s23, 1
      %s25 = scalar_select %p22, %s23, %s24
      %p28 = pneg %p22
      %p29 = scmp.eq.s32.totalorder %s13, 1
      %p30 = por %p28, %p29
      %p31 = scmp.ne.s32.totalorder %s23, %s26
      %p32 = scmp.eq.s32.totalorder %s13, 0
      %p33 = por %p31, %p32
      %p34 = scmp.ne.s32.totalorder %s23, %s26
      %p35 = scmp.eq.s32.totalorder %s18, 1
      %p36 = por %p34, %p35
      %p37 = scmp.ne.s32.totalorder %s26, %s27
      %p38 = scmp.eq.s32.totalorder %s18, 0
      %p39 = por %p37, %p38
      %p40 = scmp.ne.s32.totalorder %s26, %s27
      %p41 = scmp.eq.s32.totalorder %s19, 1
      %p42 = por %p40, %p41
      %p44 = scmp.ne.s32.totalorder %s27, %s43
      %p45 = scmp.eq.s32.totalorder %s19, 0
      %p46 = por %p44, %p45
      %s48 = sadd.s32 %s47, 1
      %p51 = scmp.eq.s32.totalorder %s13, 1
      %p52 = scmp.ne.s32.totalorder %s47, %s49
      %p53 = scmp.eq.s32.totalorder %s13, 0
      %p54 = por %p52, %p53
      %p55 = scmp.ne.s32.totalorder %s47, %s49
      %p56 = scmp.eq.s32.totalorder %s18, 1
      %p57 = por %p55, %p56
      %p58 = scmp.ne.s32.totalorder %s49, %s50
      %p59 = scmp.eq.s32.totalorder %s18, 0
      %p60 = por %p58, %p59
      %p61 = scmp.ne.s32.totalorder %s49, %s50
      %p62 = scmp.eq.s32.totalorder %s19, 1
      %p63 = por %p61, %p62
      %p65 = scmp.ne.s32.totalorder %s50, %s64
      %p66 = scmp.eq.s32.totalorder %s19, 0
      %p67 = por %p65, %p66
      %s69 = sadd.s32 %s68, 1
      %p72 = scmp.eq.s32.totalorder %s13, 1
      %p73 = scmp.ne.s32.totalorder %s68, %s70
      %p74 = scmp.eq.s32.totalorder %s13, 0
      %p75 = por %p73, %p74
      %p76 = scmp.ne.s32.totalorder %s68, %s70
      %p77 = scmp.eq.s32.totalorder %s18, 1
      %p78 = por %p76, %p77
      %p79 = scmp.ne.s32.totalorder %s70, %s71
      %p80 = scmp.eq.s32.totalorder %s18, 0
      %p81 = por %p79, %p80
      %p82 = scmp.ne.s32.totalorder %s70, %s71
      %p83 = scmp.eq.s32.totalorder %s19, 1
      %p84 = por %p82, %p83
      %p86 = scmp.ne.s32.totalorder %s71, %s85
      %p87 = scmp.eq.s32.totalorder %s19, 0
      %p88 = por %p86, %p87
      %s89 = ssub.s32 %s13, %s20
      %p90 = scmp.eq.s32.totalorder %s89, 0
      %s92 = sadd.s32 %s91, 1
      %s93 = scalar_select %p90, %s91, %s92
      %p96 = pneg %p90
      %p97 = scmp.eq.s32.totalorder %s13, 1
      %p98 = por %p96, %p97
      %p99 = scmp.ne.s32.totalorder %s91, %s94
      %p100 = scmp.eq.s32.totalorder %s13, 0
      %p101 = por %p99, %p100
      %p102 = scmp.ne.s32.totalorder %s91, %s94
      %p103 = scmp.eq.s32.totalorder %s18, 1
      %p104 = por %p102, %p103
      %p105 = scmp.ne.s32.totalorder %s94, %s95
      %p106 = scmp.eq.s32.totalorder %s18, 0
      %p107 = por %p105, %p106
      %p108 = scmp.ne.s32.totalorder %s94, %s95
      %p109 = scmp.eq.s32.totalorder %s19, 1
      %p110 = por %p108, %p109
      %p112 = scmp.ne.s32.totalorder %s95, %s111
      %p113 = scmp.eq.s32.totalorder %s19, 0
      %p114 = por %p112, %p113
      %p115 = scmp.le.s32.totalorder 1, %s13
      %p116 = scmp.lt.s32.totalorder %s13, 3
      %p117 = pnand %p115, %p116
      %p118 = pneg %p117
      // Predicated region
      $region9: #{_lambda_.1} parent=5 // pred_check
        _
      $region10: #{_lambda_.1} parent=5 // pred_check_branch
        %120 = sbr.rel (%p117) target = $region12
      $region11: #{_lambda_.1} parent=5 // pred_region
        %s121 = ssub.s32 %s13, 1
        // Predicated region
        $region13: #{_lambda_.1} parent=11 // pred_check
          %p122 = pneg %p60
        $region14: #{_lambda_.1} parent=11 // pred_check_branch
          %124 = sbr.rel (%p122) target = $region16
        $region15: #{_lambda_.1} parent=11 // pred_region
          %126 = vsyncadd [#allocation3], 0
          %s127 = sshll.u32 %s1, 4
          %s128 = int_to_ptr.hbm [resolvable:$true] %s127
          %s129 = sshll.u32 [#allocation2], 4
          %s130 = int_to_ptr.vmem [resolvable:$true] %s129
          %135 = dma.hbm_to_vmem [thread:$0]  %s128, 18432, %s130, [#allocation3], 128, 128, 8
        $region16: #{_lambda_.1} parent=11 // pred_fallthru
          _
        // Predicated region
        $region17: #{_lambda_.1} parent=11 // pred_check
          %p136 = pneg %p81
        $region18: #{_lambda_.1} parent=11 // pred_check_branch
          %138 = sbr.rel (%p136) target = $region20
        $region19: #{_lambda_.1} parent=11 // pred_region
          _
        $region20: #{_lambda_.1} parent=11 // pred_fallthru
          _
      $region12: #{_lambda_.1} parent=5 // pred_fallthru
        _
      %p139 = scmp.lt.s32.totalorder %s13, 2
      // Predicated region
      $region21: #{_lambda_.1} parent=5 // pred_check
        %p140 = pneg %p139
      $region22: #{_lambda_.1} parent=5 // pred_check_branch
        %142 = sbr.rel (%p140) target = $region24
      $region23: #{_lambda_.1} parent=5 // pred_region
        // Predicated region
        $region25: #{_lambda_.1} parent=23 // pred_check
          %p143 = pneg %p33
        $region26: #{_lambda_.1} parent=23 // pred_check_branch
          %145 = sbr.rel (%p143) target = $region28
        $region27: #{_lambda_.1} parent=23 // pred_region
          %p146 = scmp.lt.s32.totalorder %s13, 1
          %s147 = scalar_select %p146, %s13, 1
          %s148 = smul.addr %s147, 20
          %s149 = smul.addr %s148, 8
          %s150 = scalar_lea.vmem %s0, %s149
        $region28: #{_lambda_.1} parent=23 // pred_fallthru
          _
      $region24: #{_lambda_.1} parent=5 // pred_fallthru
        _
      %p151 = scmp.le.s32.totalorder 1, %s13
      %p152 = scmp.lt.s32.totalorder %s13, 3
      %p153 = pnand %p151, %p152
      %p154 = pneg %p153
      // Predicated region
      $region29: #{_lambda_.1} parent=5 // pred_check
        _
      $region30: #{_lambda_.1} parent=5 // pred_check_branch
        %156 = sbr.rel (%p153) target = $region32
      $region31: #{_lambda_.1} parent=5 // pred_region
        %s157 = ssub.s32 %s13, 1
        // Predicated region
        $region33: #{_lambda_.1} parent=31 // pred_check
          %p158 = pneg %p60
        $region34: #{_lambda_.1} parent=31 // pred_check_branch
          %160 = sbr.rel (%p158) target = $region36
        $region35: #{_lambda_.1} parent=31 // pred_region
          %162 = dma.done [#allocation3], 18432
        $region36: #{_lambda_.1} parent=31 // pred_fallthru
          _
        %p163 = scmp.lt.s32.totalorder %s18, 1
        %s164 = scalar_select %p163, %s18, 1
        %s165 = smul.addr %s164, 20
        %s166 = smul.addr %s165, 8
        %s167 = scalar_lea.vmem %s0, %s166
        %p168 = pneg %p39
        %p169 = pneg %p36
        %p170 = pneg %p60
        %p171 = pneg %p57
        %p172 = pneg %p81
        %p173 = pneg %p78
        %p174 = pneg %p107
        %p175 = pneg %p104
        %s176 = sand.u32 %s94, 1
        %s177 = scalar_lea.sflag [#allocation4], %s176
        %s178 = sand.u32 %s94, 1
        %s179 = smul.addr %s178, 64
        %s180 = scalar_lea.vmem [#allocation5], %s179
        %p181 = scmp.lt.s32.totalorder %s18, 1
        %s182 = scalar_select %p181, %s18, 1
        %s183 = smul.addr %s182, 20
        %s184 = smul.addr %s183, 8
        %s185 = scalar_lea.vmem %s0, %s184
        %v186 = vld [vmem:[%s185] sm:$0xff]
        %v187 = vld [vmem:[%s185 + $0x10] sm:$0xff]
        %v188 = vld [vmem:[%s185 + $0x20] sm:$0xff]
        %v189 = vld [vmem:[%s185 + $0x30] sm:$0xff]
        %v190 = vld [vmem:[%s185 + $0x40] sm:$0xff]
        %v191 = vld [vmem:[%s185 + $0x50] sm:$0xff]
        %v192 = vld [vmem:[%s185 + $0x60] sm:$0xff]
        %v193 = vld [vmem:[%s185 + $0x70] sm:$0xff]
        %v194 = vld [vmem:[#allocation2] sm:$0xff]
        %v195 = vld [vmem:[#allocation2 + $0x8] sm:$0xff]
        %v196 = vld [vmem:[#allocation2 + $0x10] sm:$0xff]
        %v197 = vld [vmem:[#allocation2 + $0x18] sm:$0xff]
        %v198 = vld [vmem:[#allocation2 + $0x20] sm:$0xff]
        %v199 = vld [vmem:[#allocation2 + $0x28] sm:$0xff]
        %v200 = vld [vmem:[#allocation2 + $0x30] sm:$0xff]
        %v201 = vld [vmem:[#allocation2 + $0x38] sm:$0xff]
        %v202 = vld [vmem:[#allocation2 + $0x40] sm:$0xff]
        %v203 = vld [vmem:[#allocation2 + $0x48] sm:$0xff]
        %v204 = vld [vmem:[#allocation2 + $0x50] sm:$0xff]
        %v205 = vld [vmem:[#allocation2 + $0x58] sm:$0xff]
        %v206 = vld [vmem:[#allocation2 + $0x60] sm:$0xff]
        %v207 = vld [vmem:[#allocation2 + $0x68] sm:$0xff]
        %v208 = vld [vmem:[#allocation2 + $0x70] sm:$0xff]
        %v209 = vld [vmem:[#allocation2 + $0x78] sm:$0xff]
        %v210 = vld [vmem:[%s185 + $0x1] sm:$0xff]
        %v211 = vld [vmem:[%s185 + $0x11] sm:$0xff]
        %v212 = vld [vmem:[%s185 + $0x21] sm:$0xff]
        %v213 = vld [vmem:[%s185 + $0x31] sm:$0xff]
        %v214 = vld [vmem:[%s185 + $0x41] sm:$0xff]
        %v215 = vld [vmem:[%s185 + $0x51] sm:$0xff]
        %v216 = vld [vmem:[%s185 + $0x61] sm:$0xff]
        %v217 = vld [vmem:[%s185 + $0x71] sm:$0xff]
        %s218 = scalar_lea.vmem [#allocation2], 128
        %v219 = vld [vmem:[%s218] sm:$0xff]
        %v220 = vld [vmem:[%s218 + $0x8] sm:$0xff]
        %v221 = vld [vmem:[%s218 + $0x10] sm:$0xff]
        %v222 = vld [vmem:[%s218 + $0x18] sm:$0xff]
        %v223 = vld [vmem:[%s218 + $0x20] sm:$0xff]
        %v224 = vld [vmem:[%s218 + $0x28] sm:$0xff]
        %v225 = vld [vmem:[%s218 + $0x30] sm:$0xff]
        %v226 = vld [vmem:[%s218 + $0x38] sm:$0xff]
        %v227 = vld [vmem:[%s218 + $0x40] sm:$0xff]
        %v228 = vld [vmem:[%s218 + $0x48] sm:$0xff]
        %v229 = vld [vmem:[%s218 + $0x50] sm:$0xff]
        %v230 = vld [vmem:[%s218 + $0x58] sm:$0xff]
        %v231 = vld [vmem:[%s218 + $0x60] sm:$0xff]
        %v232 = vld [vmem:[%s218 + $0x68] sm:$0xff]
        %v233 = vld [vmem:[%s218 + $0x70] sm:$0xff]
        %v234 = vld [vmem:[%s218 + $0x78] sm:$0xff]
        %235 = vmatpush.msra.mxu0 %v234
        %236 = vmatpush.msra.mxu0 %v233
        %237 = vmatpush.msra.mxu0 %v232
        %238 = vmatpush.msra.mxu0 %v231
        %239 = vmatpush.msra.mxu0 %v230
        %240 = vmatpush.msra.mxu0 %v229
        %241 = vmatpush.msra.mxu0 %v228
        %242 = vmatpush.msra.mxu0 %v227
        %243 = vmatpush.msra.mxu0 %v226
        %244 = vmatpush.msra.mxu0 %v225
        %245 = vmatpush.msra.mxu0 %v224
        %246 = vmatpush.msra.mxu0 %v223
        %247 = vmatpush.msra.mxu0 %v222
        %248 = vmatpush.msra.mxu0 %v221
        %249 = vmatpush.msra.mxu0 %v220
        %250 = vmatpush.msra.mxu0 %v219
        %251 = vmatmul.f32.gmra.mxu0 %v210
        %v252 = vpop.f32.mrf.mxu0
        %v253 = vadd.f32 0.0, %v252
        %254 = vmatmul.f32.gmra.mxu0 %v211
        %v255 = vpop.f32.mrf.mxu0
        %v256 = vadd.f32 0.0, %v255
        %257 = vmatmul.f32.gmra.mxu0 %v212
        %v258 = vpop.f32.mrf.mxu0
        %v259 = vadd.f32 0.0, %v258
        %260 = vmatmul.f32.gmra.mxu0 %v213
        %v261 = vpop.f32.mrf.mxu0
        %v262 = vadd.f32 0.0, %v261
        %263 = vmatmul.f32.gmra.mxu0 %v214
        %v264 = vpop.f32.mrf.mxu0
        %v265 = vadd.f32 0.0, %v264
        %266 = vmatmul.f32.gmra.mxu0 %v215
        %v267 = vpop.f32.mrf.mxu0
        %v268 = vadd.f32 0.0, %v267
        %269 = vmatmul.f32.gmra.mxu0 %v216
        %v270 = vpop.f32.mrf.mxu0
        %v271 = vadd.f32 0.0, %v270
        %272 = vmatmul.f32.gmra.mxu0 %v217
        %v273 = vpop.f32.mrf.mxu0
        %v274 = vadd.f32 0.0, %v273
        %275 = vdwg.mxu0
        %276 = vmatpush.msra.mxu0 %v209
        %277 = vmatpush.msra.mxu0 %v208
        %278 = vmatpush.msra.mxu0 %v207
        %279 = vmatpush.msra.mxu0 %v206
        %280 = vmatpush.msra.mxu0 %v205
        %281 = vmatpush.msra.mxu0 %v204
        %282 = vmatpush.msra.mxu0 %v203
        %283 = vmatpush.msra.mxu0 %v202
        %284 = vmatpush.msra.mxu0 %v201
        %285 = vmatpush.msra.mxu0 %v200
        %286 = vmatpush.msra.mxu0 %v199
        %287 = vmatpush.msra.mxu0 %v198
        %288 = vmatpush.msra.mxu0 %v197
        %289 = vmatpush.msra.mxu0 %v196
        %290 = vmatpush.msra.mxu0 %v195
        %291 = vmatpush.msra.mxu0 %v194
        %292 = vmatmul.f32.gmra.mxu0 %v186
        %v293 = vpop.f32.mrf.mxu0
        %v294 = vadd.f32 %v253, %v293
        %295 = vmatmul.f32.gmra.mxu0 %v187
        %v296 = vpop.f32.mrf.mxu0
        %v297 = vadd.f32 %v256, %v296
        %298 = vmatmul.f32.gmra.mxu0 %v188
        %v299 = vpop.f32.mrf.mxu0
        %v300 = vadd.f32 %v259, %v299
        %301 = vmatmul.f32.gmra.mxu0 %v189
        %v302 = vpop.f32.mrf.mxu0
        %v303 = vadd.f32 %v262, %v302
        %304 = vmatmul.f32.gmra.mxu0 %v190
        %v305 = vpop.f32.mrf.mxu0
        %v306 = vadd.f32 %v265, %v305
        %307 = vmatmul.f32.gmra.mxu0 %v191
        %v308 = vpop.f32.mrf.mxu0
        %v309 = vadd.f32 %v268, %v308
        %310 = vmatmul.f32.gmra.mxu0 %v192
        %v311 = vpop.f32.mrf.mxu0
        %v312 = vadd.f32 %v271, %v311
        %313 = vmatmul.f32.gmra.mxu0 %v193
        %v314 = vpop.f32.mrf.mxu0
        %v315 = vadd.f32 %v274, %v314
        %316 = vdwg.mxu0
        %v317 = vld [vmem:[%s185 + $0x2] sm:$0xff]
        %v318 = vld [vmem:[%s185 + $0x12] sm:$0xff]
        %v319 = vld [vmem:[%s185 + $0x22] sm:$0xff]
        %v320 = vld [vmem:[%s185 + $0x32] sm:$0xff]
        %v321 = vld [vmem:[%s185 + $0x42] sm:$0xff]
        %v322 = vld [vmem:[%s185 + $0x52] sm:$0xff]
        %v323 = vld [vmem:[%s185 + $0x62] sm:$0xff]
        %v324 = vld [vmem:[%s185 + $0x72] sm:$0xff]
        %s325 = scalar_lea.vmem [#allocation2], 256
        %v326 = vld [vmem:[%s325] sm:$0xff]
        %v327 = vld [vmem:[%s325 + $0x8] sm:$0xff]
        %v328 = vld [vmem:[%s325 + $0x10] sm:$0xff]
        %v329 = vld [vmem:[%s325 + $0x18] sm:$0xff]
        %v330 = vld [vmem:[%s325 + $0x20] sm:$0xff]
        %v331 = vld [vmem:[%s325 + $0x28] sm:$0xff]
        %v332 = vld [vmem:[%s325 + $0x30] sm:$0xff]
        %v333 = vld [vmem:[%s325 + $0x38] sm:$0xff]
        %v334 = vld [vmem:[%s325 + $0x40] sm:$0xff]
        %v335 = vld [vmem:[%s325 + $0x48] sm:$0xff]
        %v336 = vld [vmem:[%s325 + $0x50] sm:$0xff]
        %v337 = vld [vmem:[%s325 + $0x58] sm:$0xff]
        %v338 = vld [vmem:[%s325 + $0x60] sm:$0xff]
        %v339 = vld [vmem:[%s325 + $0x68] sm:$0xff]
        %v340 = vld [vmem:[%s325 + $0x70] sm:$0xff]
        %v341 = vld [vmem:[%s325 + $0x78] sm:$0xff]
        %342 = vmatpush.msra.mxu0 %v341
        %343 = vmatpush.msra.mxu0 %v340
        %344 = vmatpush.msra.mxu0 %v339
        %345 = vmatpush.msra.mxu0 %v338
        %346 = vmatpush.msra.mxu0 %v337
        %347 = vmatpush.msra.mxu0 %v336
        %348 = vmatpush.msra.mxu0 %v335
        %349 = vmatpush.msra.mxu0 %v334
        %350 = vmatpush.msra.mxu0 %v333
        %351 = vmatpush.msra.mxu0 %v332
        %352 = vmatpush.msra.mxu0 %v331
        %353 = vmatpush.msra.mxu0 %v330
        %354 = vmatpush.msra.mxu0 %v329
        %355 = vmatpush.msra.mxu0 %v328
        %356 = vmatpush.msra.mxu0 %v327
        %357 = vmatpush.msra.mxu0 %v326
        %358 = vmatmul.f32.gmra.mxu0 %v317
        %v359 = vpop.f32.mrf.mxu0
        %v360 = vadd.f32 0.0, %v359
        %361 = vmatmul.f32.gmra.mxu0 %v318
        %v362 = vpop.f32.mrf.mxu0
        %v363 = vadd.f32 0.0, %v362
        %364 = vmatmul.f32.gmra.mxu0 %v319
        %v365 = vpop.f32.mrf.mxu0
        %v366 = vadd.f32 0.0, %v365
        %367 = vmatmul.f32.gmra.mxu0 %v320
        %v368 = vpop.f32.mrf.mxu0
        %v369 = vadd.f32 0.0, %v368
        %370 = vmatmul.f32.gmra.mxu0 %v321
        %v371 = vpop.f32.mrf.mxu0
        %v372 = vadd.f32 0.0, %v371
        %373 = vmatmul.f32.gmra.mxu0 %v322
        %v374 = vpop.f32.mrf.mxu0
        %v375 = vadd.f32 0.0, %v374
        %376 = vmatmul.f32.gmra.mxu0 %v323
        %v377 = vpop.f32.mrf.mxu0
        %v378 = vadd.f32 0.0, %v377
        %379 = vmatmul.f32.gmra.mxu0 %v324
        %v380 = vpop.f32.mrf.mxu0
        %v381 = vadd.f32 0.0, %v380
        %382 = vdwg.mxu0
        %v383 = vadd.f32 %v294, %v360
        %v384 = vadd.f32 %v297, %v363
        %v385 = vadd.f32 %v300, %v366
        %v386 = vadd.f32 %v303, %v369
        %v387 = vadd.f32 %v306, %v372
        %v388 = vadd.f32 %v309, %v375
        %v389 = vadd.f32 %v312, %v378
        %v390 = vadd.f32 %v315, %v381
        %s391 = scalar_lea.vmem %s185, 16
        %v392 = vld [vmem:[%s391] sm:$0xff]
        %v393 = vld [vmem:[%s391 + $0x10] sm:$0xff]
        %v394 = vld [vmem:[%s391 + $0x20] sm:$0xff]
        %v395 = vld [vmem:[%s391 + $0x30] sm:$0xff]
        %v396 = vld [vmem:[%s391 + $0x40] sm:$0xff]
        %v397 = vld [vmem:[%s391 + $0x50] sm:$0xff]
        %v398 = vld [vmem:[%s391 + $0x60] sm:$0xff]
        %v399 = vld [vmem:[%s391 + $0x70] sm:$0xff]
        %s400 = scalar_lea.vmem [#allocation2], 384
        %v401 = vld [vmem:[%s400] sm:$0xff]
        %v402 = vld [vmem:[%s400 + $0x8] sm:$0xff]
        %v403 = vld [vmem:[%s400 + $0x10] sm:$0xff]
        %v404 = vld [vmem:[%s400 + $0x18] sm:$0xff]
        %v405 = vld [vmem:[%s400 + $0x20] sm:$0xff]
        %v406 = vld [vmem:[%s400 + $0x28] sm:$0xff]
        %v407 = vld [vmem:[%s400 + $0x30] sm:$0xff]
        %v408 = vld [vmem:[%s400 + $0x38] sm:$0xff]
        %v409 = vld [vmem:[%s400 + $0x40] sm:$0xff]
        %v410 = vld [vmem:[%s400 + $0x48] sm:$0xff]
        %v411 = vld [vmem:[%s400 + $0x50] sm:$0xff]
        %v412 = vld [vmem:[%s400 + $0x58] sm:$0xff]
        %v413 = vld [vmem:[%s400 + $0x60] sm:$0xff]
        %v414 = vld [vmem:[%s400 + $0x68] sm:$0xff]
        %v415 = vld [vmem:[%s400 + $0x70] sm:$0xff]
        %v416 = vld [vmem:[%s400 + $0x78] sm:$0xff]
        %417 = vmatpush.msra.mxu0 %v416
        %418 = vmatpush.msra.mxu0 %v415
        %419 = vmatpush.msra.mxu0 %v414
        %420 = vmatpush.msra.mxu0 %v413
        %421 = vmatpush.msra.mxu0 %v412
        %422 = vmatpush.msra.mxu0 %v411
        %423 = vmatpush.msra.mxu0 %v410
        %424 = vmatpush.msra.mxu0 %v409
        %425 = vmatpush.msra.mxu0 %v408
        %426 = vmatpush.msra.mxu0 %v407
        %427 = vmatpush.msra.mxu0 %v406
        %428 = vmatpush.msra.mxu0 %v405
        %429 = vmatpush.msra.mxu0 %v404
        %430 = vmatpush.msra.mxu0 %v403
        %431 = vmatpush.msra.mxu0 %v402
        %432 = vmatpush.msra.mxu0 %v401
        %433 = vmatmul.f32.gmra.mxu0 %v392
        %v434 = vpop.f32.mrf.mxu0
        %v435 = vadd.f32 0.0, %v434
        %436 = vmatmul.f32.gmra.mxu0 %v393
        %v437 = vpop.f32.mrf.mxu0
        %v438 = vadd.f32 0.0, %v437
        %439 = vmatmul.f32.gmra.mxu0 %v394
        %v440 = vpop.f32.mrf.mxu0
        %v441 = vadd.f32 0.0, %v440
        %442 = vmatmul.f32.gmra.mxu0 %v395
        %v443 = vpop.f32.mrf.mxu0
        %v444 = vadd.f32 0.0, %v443
        %445 = vmatmul.f32.gmra.mxu0 %v396
        %v446 = vpop.f32.mrf.mxu0
        %v447 = vadd.f32 0.0, %v446
        %448 = vmatmul.f32.gmra.mxu0 %v397
        %v449 = vpop.f32.mrf.mxu0
        %v450 = vadd.f32 0.0, %v449
        %451 = vmatmul.f32.gmra.mxu0 %v398
        %v452 = vpop.f32.mrf.mxu0
        %v453 = vadd.f32 0.0, %v452
        %454 = vmatmul.f32.gmra.mxu0 %v399
        %v455 = vpop.f32.mrf.mxu0
        %v456 = vadd.f32 0.0, %v455
        %457 = vdwg.mxu0
        %v458 = vadd.f32 %v383, %v435
        %v459 = vadd.f32 %v384, %v438
        %v460 = vadd.f32 %v385, %v441
        %v461 = vadd.f32 %v386, %v444
        %v462 = vadd.f32 %v387, %v447
        %v463 = vadd.f32 %v388, %v450
        %v464 = vadd.f32 %v389, %v453
        %v465 = vadd.f32 %v390, %v456
        %v466 = vld [vmem:[%s391 + $0x1] sm:$0xff]
        %v467 = vld [vmem:[%s391 + $0x11] sm:$0xff]
        %v468 = vld [vmem:[%s391 + $0x21] sm:$0xff]
        %v469 = vld [vmem:[%s391 + $0x31] sm:$0xff]
        %v470 = vld [vmem:[%s391 + $0x41] sm:$0xff]
        %v471 = vld [vmem:[%s391 + $0x51] sm:$0xff]
        %v472 = vld [vmem:[%s391 + $0x61] sm:$0xff]
        %v473 = vld [vmem:[%s391 + $0x71] sm:$0xff]
        %s474 = scalar_lea.vmem [#allocation2], 512
        %v475 = vld [vmem:[%s474] sm:$0xff]
        %v476 = vld [vmem:[%s474 + $0x8] sm:$0xff]
        %v477 = vld [vmem:[%s474 + $0x10] sm:$0xff]
        %v478 = vld [vmem:[%s474 + $0x18] sm:$0xff]
        %v479 = vld [vmem:[%s474 + $0x20] sm:$0xff]
        %v480 = vld [vmem:[%s474 + $0x28] sm:$0xff]
        %v481 = vld [vmem:[%s474 + $0x30] sm:$0xff]
        %v482 = vld [vmem:[%s474 + $0x38] sm:$0xff]
        %v483 = vld [vmem:[%s474 + $0x40] sm:$0xff]
        %v484 = vld [vmem:[%s474 + $0x48] sm:$0xff]
        %v485 = vld [vmem:[%s474 + $0x50] sm:$0xff]
        %v486 = vld [vmem:[%s474 + $0x58] sm:$0xff]
        %v487 = vld [vmem:[%s474 + $0x60] sm:$0xff]
        %v488 = vld [vmem:[%s474 + $0x68] sm:$0xff]
        %v489 = vld [vmem:[%s474 + $0x70] sm:$0xff]
        %v490 = vld [vmem:[%s474 + $0x78] sm:$0xff]
        %491 = vmatpush.msra.mxu0 %v490
        %492 = vmatpush.msra.mxu0 %v489
        %493 = vmatpush.msra.mxu0 %v488
        %494 = vmatpush.msra.mxu0 %v487
        %495 = vmatpush.msra.mxu0 %v486
        %496 = vmatpush.msra.mxu0 %v485
        %497 = vmatpush.msra.mxu0 %v484
        %498 = vmatpush.msra.mxu0 %v483
        %499 = vmatpush.msra.mxu0 %v482
        %500 = vmatpush.msra.mxu0 %v481
        %501 = vmatpush.msra.mxu0 %v480
        %502 = vmatpush.msra.mxu0 %v479
        %503 = vmatpush.msra.mxu0 %v478
        %504 = vmatpush.msra.mxu0 %v477
        %505 = vmatpush.msra.mxu0 %v476
        %506 = vmatpush.msra.mxu0 %v475
        %507 = vmatmul.f32.gmra.mxu0 %v466
        %v508 = vpop.f32.mrf.mxu0
        %v509 = vadd.f32 0.0, %v508
        %510 = vmatmul.f32.gmra.mxu0 %v467
        %v511 = vpop.f32.mrf.mxu0
        %v512 = vadd.f32 0.0, %v511
        %513 = vmatmul.f32.gmra.mxu0 %v468
        %v514 = vpop.f32.mrf.mxu0
        %v515 = vadd.f32 0.0, %v514
        %516 = vmatmul.f32.gmra.mxu0 %v469
        %v517 = vpop.f32.mrf.mxu0
        %v518 = vadd.f32 0.0, %v517
        %519 = vmatmul.f32.gmra.mxu0 %v470
        %v520 = vpop.f32.mrf.mxu0
        %v521 = vadd.f32 0.0, %v520
        %522 = vmatmul.f32.gmra.mxu0 %v471
        %v523 = vpop.f32.mrf.mxu0
        %v524 = vadd.f32 0.0, %v523
        %525 = vmatmul.f32.gmra.mxu0 %v472
        %v526 = vpop.f32.mrf.mxu0
        %v527 = vadd.f32 0.0, %v526
        %528 = vmatmul.f32.gmra.mxu0 %v473
        %v529 = vpop.f32.mrf.mxu0
        %v530 = vadd.f32 0.0, %v529
        %531 = vdwg.mxu0
        %v532 = vadd.f32 %v458, %v509
        %v533 = vadd.f32 %v459, %v512
        %v534 = vadd.f32 %v460, %v515
        %v535 = vadd.f32 %v461, %v518
        %v536 = vadd.f32 %v462, %v521
        %v537 = vadd.f32 %v463, %v524
        %v538 = vadd.f32 %v464, %v527
        %v539 = vadd.f32 %v465, %v530
        %v540 = vld [vmem:[%s391 + $0x2] sm:$0xff]
        %v541 = vld [vmem:[%s391 + $0x12] sm:$0xff]
        %v542 = vld [vmem:[%s391 + $0x22] sm:$0xff]
        %v543 = vld [vmem:[%s391 + $0x32] sm:$0xff]
        %v544 = vld [vmem:[%s391 + $0x42] sm:$0xff]
        %v545 = vld [vmem:[%s391 + $0x52] sm:$0xff]
        %v546 = vld [vmem:[%s391 + $0x62] sm:$0xff]
        %v547 = vld [vmem:[%s391 + $0x72] sm:$0xff]
        %s548 = scalar_lea.vmem [#allocation2], 640
        %v549 = vld [vmem:[%s548] sm:$0xff]
        %v550 = vld [vmem:[%s548 + $0x8] sm:$0xff]
        %v551 = vld [vmem:[%s548 + $0x10] sm:$0xff]
        %v552 = vld [vmem:[%s548 + $0x18] sm:$0xff]
        %v553 = vld [vmem:[%s548 + $0x20] sm:$0xff]
        %v554 = vld [vmem:[%s548 + $0x28] sm:$0xff]
        %v555 = vld [vmem:[%s548 + $0x30] sm:$0xff]
        %v556 = vld [vmem:[%s548 + $0x38] sm:$0xff]
        %v557 = vld [vmem:[%s548 + $0x40] sm:$0xff]
        %v558 = vld [vmem:[%s548 + $0x48] sm:$0xff]
        %v559 = vld [vmem:[%s548 + $0x50] sm:$0xff]
        %v560 = vld [vmem:[%s548 + $0x58] sm:$0xff]
        %v561 = vld [vmem:[%s548 + $0x60] sm:$0xff]
        %v562 = vld [vmem:[%s548 + $0x68] sm:$0xff]
        %v563 = vld [vmem:[%s548 + $0x70] sm:$0xff]
        %v564 = vld [vmem:[%s548 + $0x78] sm:$0xff]
        %565 = vmatpush.msra.mxu0 %v564
        %566 = vmatpush.msra.mxu0 %v563
        %567 = vmatpush.msra.mxu0 %v562
        %568 = vmatpush.msra.mxu0 %v561
        %569 = vmatpush.msra.mxu0 %v560
        %570 = vmatpush.msra.mxu0 %v559
        %571 = vmatpush.msra.mxu0 %v558
        %572 = vmatpush.msra.mxu0 %v557
        %573 = vmatpush.msra.mxu0 %v556
        %574 = vmatpush.msra.mxu0 %v555
        %575 = vmatpush.msra.mxu0 %v554
        %576 = vmatpush.msra.mxu0 %v553
        %577 = vmatpush.msra.mxu0 %v552
        %578 = vmatpush.msra.mxu0 %v551
        %579 = vmatpush.msra.mxu0 %v550
        %580 = vmatpush.msra.mxu0 %v549
        %581 = vmatmul.f32.gmra.mxu0 %v540
        %v582 = vpop.f32.mrf.mxu0
        %v583 = vadd.f32 0.0, %v582
        %584 = vmatmul.f32.gmra.mxu0 %v541
        %v585 = vpop.f32.mrf.mxu0
        %v586 = vadd.f32 0.0, %v585
        %587 = vmatmul.f32.gmra.mxu0 %v542
        %v588 = vpop.f32.mrf.mxu0
        %v589 = vadd.f32 0.0, %v588
        %590 = vmatmul.f32.gmra.mxu0 %v543
        %v591 = vpop.f32.mrf.mxu0
        %v592 = vadd.f32 0.0, %v591
        %593 = vmatmul.f32.gmra.mxu0 %v544
        %v594 = vpop.f32.mrf.mxu0
        %v595 = vadd.f32 0.0, %v594
        %596 = vmatmul.f32.gmra.mxu0 %v545
        %v597 = vpop.f32.mrf.mxu0
        %v598 = vadd.f32 0.0, %v597
        %599 = vmatmul.f32.gmra.mxu0 %v546
        %v600 = vpop.f32.mrf.mxu0
        %v601 = vadd.f32 0.0, %v600
        %602 = vmatmul.f32.gmra.mxu0 %v547
        %v603 = vpop.f32.mrf.mxu0
        %v604 = vadd.f32 0.0, %v603
        %605 = vdwg.mxu0
        %v606 = vadd.f32 %v532, %v583
        %v607 = vadd.f32 %v533, %v586
        %v608 = vadd.f32 %v534, %v589
        %v609 = vadd.f32 %v535, %v592
        %v610 = vadd.f32 %v536, %v595
        %v611 = vadd.f32 %v537, %v598
        %v612 = vadd.f32 %v538, %v601
        %v613 = vadd.f32 %v539, %v604
        %s614 = scalar_lea.vmem %s185, 32
        %v615 = vld [vmem:[%s614] sm:$0xff]
        %v616 = vld [vmem:[%s614 + $0x10] sm:$0xff]
        %v617 = vld [vmem:[%s614 + $0x20] sm:$0xff]
        %v618 = vld [vmem:[%s614 + $0x30] sm:$0xff]
        %v619 = vld [vmem:[%s614 + $0x40] sm:$0xff]
        %v620 = vld [vmem:[%s614 + $0x50] sm:$0xff]
        %v621 = vld [vmem:[%s614 + $0x60] sm:$0xff]
        %v622 = vld [vmem:[%s614 + $0x70] sm:$0xff]
        %s623 = scalar_lea.vmem [#allocation2], 768
        %v624 = vld [vmem:[%s623] sm:$0xff]
        %v625 = vld [vmem:[%s623 + $0x8] sm:$0xff]
        %v626 = vld [vmem:[%s623 + $0x10] sm:$0xff]
        %v627 = vld [vmem:[%s623 + $0x18] sm:$0xff]
        %v628 = vld [vmem:[%s623 + $0x20] sm:$0xff]
        %v629 = vld [vmem:[%s623 + $0x28] sm:$0xff]
        %v630 = vld [vmem:[%s623 + $0x30] sm:$0xff]
        %v631 = vld [vmem:[%s623 + $0x38] sm:$0xff]
        %v632 = vld [vmem:[%s623 + $0x40] sm:$0xff]
        %v633 = vld [vmem:[%s623 + $0x48] sm:$0xff]
        %v634 = vld [vmem:[%s623 + $0x50] sm:$0xff]
        %v635 = vld [vmem:[%s623 + $0x58] sm:$0xff]
        %v636 = vld [vmem:[%s623 + $0x60] sm:$0xff]
        %v637 = vld [vmem:[%s623 + $0x68] sm:$0xff]
        %v638 = vld [vmem:[%s623 + $0x70] sm:$0xff]
        %v639 = vld [vmem:[%s623 + $0x78] sm:$0xff]
        %640 = vmatpush.msra.mxu0 %v639
        %641 = vmatpush.msra.mxu0 %v638
        %642 = vmatpush.msra.mxu0 %v637
        %643 = vmatpush.msra.mxu0 %v636
        %644 = vmatpush.msra.mxu0 %v635
        %645 = vmatpush.msra.mxu0 %v634
        %646 = vmatpush.msra.mxu0 %v633
        %647 = vmatpush.msra.mxu0 %v632
        %648 = vmatpush.msra.mxu0 %v631
        %649 = vmatpush.msra.mxu0 %v630
        %650 = vmatpush.msra.mxu0 %v629
        %651 = vmatpush.msra.mxu0 %v628
        %652 = vmatpush.msra.mxu0 %v627
        %653 = vmatpush.msra.mxu0 %v626
        %654 = vmatpush.msra.mxu0 %v625
        %655 = vmatpush.msra.mxu0 %v624
        %656 = vmatmul.f32.gmra.mxu0 %v615
        %v657 = vpop.f32.mrf.mxu0
        %v658 = vadd.f32 0.0, %v657
        %659 = vmatmul.f32.gmra.mxu0 %v616
        %v660 = vpop.f32.mrf.mxu0
        %v661 = vadd.f32 0.0, %v660
        %662 = vmatmul.f32.gmra.mxu0 %v617
        %v663 = vpop.f32.mrf.mxu0
        %v664 = vadd.f32 0.0, %v663
        %665 = vmatmul.f32.gmra.mxu0 %v618
        %v666 = vpop.f32.mrf.mxu0
        %v667 = vadd.f32 0.0, %v666
        %668 = vmatmul.f32.gmra.mxu0 %v619
        %v669 = vpop.f32.mrf.mxu0
        %v670 = vadd.f32 0.0, %v669
        %671 = vmatmul.f32.gmra.mxu0 %v620
        %v672 = vpop.f32.mrf.mxu0
        %v673 = vadd.f32 0.0, %v672
        %674 = vmatmul.f32.gmra.mxu0 %v621
        %v675 = vpop.f32.mrf.mxu0
        %v676 = vadd.f32 0.0, %v675
        %677 = vmatmul.f32.gmra.mxu0 %v622
        %v678 = vpop.f32.mrf.mxu0
        %v679 = vadd.f32 0.0, %v678
        %680 = vdwg.mxu0
        %v681 = vadd.f32 %v606, %v658
        %v682 = vadd.f32 %v607, %v661
        %v683 = vadd.f32 %v608, %v664
        %v684 = vadd.f32 %v609, %v667
        %v685 = vadd.f32 %v610, %v670
        %v686 = vadd.f32 %v611, %v673
        %v687 = vadd.f32 %v612, %v676
        %v688 = vadd.f32 %v613, %v679
        %v689 = vld [vmem:[%s614 + $0x1] sm:$0xff]
        %v690 = vld [vmem:[%s614 + $0x11] sm:$0xff]
        %v691 = vld [vmem:[%s614 + $0x21] sm:$0xff]
        %v692 = vld [vmem:[%s614 + $0x31] sm:$0xff]
        %v693 = vld [vmem:[%s614 + $0x41] sm:$0xff]
        %v694 = vld [vmem:[%s614 + $0x51] sm:$0xff]
        %v695 = vld [vmem:[%s614 + $0x61] sm:$0xff]
        %v696 = vld [vmem:[%s614 + $0x71] sm:$0xff]
        %s697 = scalar_lea.vmem [#allocation2], 896
        %v698 = vld [vmem:[%s697] sm:$0xff]
        %v699 = vld [vmem:[%s697 + $0x8] sm:$0xff]
        %v700 = vld [vmem:[%s697 + $0x10] sm:$0xff]
        %v701 = vld [vmem:[%s697 + $0x18] sm:$0xff]
        %v702 = vld [vmem:[%s697 + $0x20] sm:$0xff]
        %v703 = vld [vmem:[%s697 + $0x28] sm:$0xff]
        %v704 = vld [vmem:[%s697 + $0x30] sm:$0xff]
        %v705 = vld [vmem:[%s697 + $0x38] sm:$0xff]
        %v706 = vld [vmem:[%s697 + $0x40] sm:$0xff]
        %v707 = vld [vmem:[%s697 + $0x48] sm:$0xff]
        %v708 = vld [vmem:[%s697 + $0x50] sm:$0xff]
        %v709 = vld [vmem:[%s697 + $0x58] sm:$0xff]
        %v710 = vld [vmem:[%s697 + $0x60] sm:$0xff]
        %v711 = vld [vmem:[%s697 + $0x68] sm:$0xff]
        %v712 = vld [vmem:[%s697 + $0x70] sm:$0xff]
        %v713 = vld [vmem:[%s697 + $0x78] sm:$0xff]
        %714 = vmatpush.msra.mxu0 %v713
        %715 = vmatpush.msra.mxu0 %v712
        %716 = vmatpush.msra.mxu0 %v711
        %717 = vmatpush.msra.mxu0 %v710
        %718 = vmatpush.msra.mxu0 %v709
        %719 = vmatpush.msra.mxu0 %v708
        %720 = vmatpush.msra.mxu0 %v707
        %721 = vmatpush.msra.mxu0 %v706
        %722 = vmatpush.msra.mxu0 %v705
        %723 = vmatpush.msra.mxu0 %v704
        %724 = vmatpush.msra.mxu0 %v703
        %725 = vmatpush.msra.mxu0 %v702
        %726 = vmatpush.msra.mxu0 %v701
        %727 = vmatpush.msra.mxu0 %v700
        %728 = vmatpush.msra.mxu0 %v699
        %729 = vmatpush.msra.mxu0 %v698
        %730 = vmatmul.f32.gmra.mxu0 %v689
        %v731 = vpop.f32.mrf.mxu0
        %v732 = vadd.f32 0.0, %v731
        %733 = vmatmul.f32.gmra.mxu0 %v690
        %v734 = vpop.f32.mrf.mxu0
        %v735 = vadd.f32 0.0, %v734
        %736 = vmatmul.f32.gmra.mxu0 %v691
        %v737 = vpop.f32.mrf.mxu0
        %v738 = vadd.f32 0.0, %v737
        %739 = vmatmul.f32.gmra.mxu0 %v692
        %v740 = vpop.f32.mrf.mxu0
        %v741 = vadd.f32 0.0, %v740
        %742 = vmatmul.f32.gmra.mxu0 %v693
        %v743 = vpop.f32.mrf.mxu0
        %v744 = vadd.f32 0.0, %v743
        %745 = vmatmul.f32.gmra.mxu0 %v694
        %v746 = vpop.f32.mrf.mxu0
        %v747 = vadd.f32 0.0, %v746
        %748 = vmatmul.f32.gmra.mxu0 %v695
        %v749 = vpop.f32.mrf.mxu0
        %v750 = vadd.f32 0.0, %v749
        %751 = vmatmul.f32.gmra.mxu0 %v696
        %v752 = vpop.f32.mrf.mxu0
        %v753 = vadd.f32 0.0, %v752
        %754 = vdwg.mxu0
        %v755 = vadd.f32 %v681, %v732
        %v756 = vadd.f32 %v682, %v735
        %v757 = vadd.f32 %v683, %v738
        %v758 = vadd.f32 %v684, %v741
        %v759 = vadd.f32 %v685, %v744
        %v760 = vadd.f32 %v686, %v747
        %v761 = vadd.f32 %v687, %v750
        %v762 = vadd.f32 %v688, %v753
        %v763 = vld [vmem:[%s614 + $0x2] sm:$0xff]
        %v764 = vld [vmem:[%s614 + $0x12] sm:$0xff]
        %v765 = vld [vmem:[%s614 + $0x22] sm:$0xff]
        %v766 = vld [vmem:[%s614 + $0x32] sm:$0xff]
        %v767 = vld [vmem:[%s614 + $0x42] sm:$0xff]
        %v768 = vld [vmem:[%s614 + $0x52] sm:$0xff]
        %v769 = vld [vmem:[%s614 + $0x62] sm:$0xff]
        %v770 = vld [vmem:[%s614 + $0x72] sm:$0xff]
        %s771 = scalar_lea.vmem [#allocation2], 1024
        %v772 = vld [vmem:[%s771] sm:$0xff]
        %v773 = vld [vmem:[%s771 + $0x8] sm:$0xff]
        %v774 = vld [vmem:[%s771 + $0x10] sm:$0xff]
        %v775 = vld [vmem:[%s771 + $0x18] sm:$0xff]
        %v776 = vld [vmem:[%s771 + $0x20] sm:$0xff]
        %v777 = vld [vmem:[%s771 + $0x28] sm:$0xff]
        %v778 = vld [vmem:[%s771 + $0x30] sm:$0xff]
        %v779 = vld [vmem:[%s771 + $0x38] sm:$0xff]
        %v780 = vld [vmem:[%s771 + $0x40] sm:$0xff]
        %v781 = vld [vmem:[%s771 + $0x48] sm:$0xff]
        %v782 = vld [vmem:[%s771 + $0x50] sm:$0xff]
        %v783 = vld [vmem:[%s771 + $0x58] sm:$0xff]
        %v784 = vld [vmem:[%s771 + $0x60] sm:$0xff]
        %v785 = vld [vmem:[%s771 + $0x68] sm:$0xff]
        %v786 = vld [vmem:[%s771 + $0x70] sm:$0xff]
        %v787 = vld [vmem:[%s771 + $0x78] sm:$0xff]
        %788 = vmatpush.msra.mxu0 %v787
        %789 = vmatpush.msra.mxu0 %v786
        %790 = vmatpush.msra.mxu0 %v785
        %791 = vmatpush.msra.mxu0 %v784
        %792 = vmatpush.msra.mxu0 %v783
        %793 = vmatpush.msra.mxu0 %v782
        %794 = vmatpush.msra.mxu0 %v781
        %795 = vmatpush.msra.mxu0 %v780
        %796 = vmatpush.msra.mxu0 %v779
        %797 = vmatpush.msra.mxu0 %v778
        %798 = vmatpush.msra.mxu0 %v777
        %799 = vmatpush.msra.mxu0 %v776
        %800 = vmatpush.msra.mxu0 %v775
        %801 = vmatpush.msra.mxu0 %v774
        %802 = vmatpush.msra.mxu0 %v773
        %803 = vmatpush.msra.mxu0 %v772
        %804 = vmatmul.f32.gmra.mxu0 %v763
        %v805 = vpop.f32.mrf.mxu0
        %v806 = vadd.f32 0.0, %v805
        %807 = vmatmul.f32.gmra.mxu0 %v764
        %v808 = vpop.f32.mrf.mxu0
        %v809 = vadd.f32 0.0, %v808
        %810 = vmatmul.f32.gmra.mxu0 %v765
        %v811 = vpop.f32.mrf.mxu0
        %v812 = vadd.f32 0.0, %v811
        %813 = vmatmul.f32.gmra.mxu0 %v766
        %v814 = vpop.f32.mrf.mxu0
        %v815 = vadd.f32 0.0, %v814
        %816 = vmatmul.f32.gmra.mxu0 %v767
        %v817 = vpop.f32.mrf.mxu0
        %v818 = vadd.f32 0.0, %v817
        %819 = vmatmul.f32.gmra.mxu0 %v768
        %v820 = vpop.f32.mrf.mxu0
        %v821 = vadd.f32 0.0, %v820
        %822 = vmatmul.f32.gmra.mxu0 %v769
        %v823 = vpop.f32.mrf.mxu0
        %v824 = vadd.f32 0.0, %v823
        %825 = vmatmul.f32.gmra.mxu0 %v770
        %v826 = vpop.f32.mrf.mxu0
        %v827 = vadd.f32 0.0, %v826
        %828 = vdwg.mxu0
        %v829 = vadd.f32 %v755, %v806
        %v830 = vadd.f32 %v756, %v809
        %v831 = vadd.f32 %v757, %v812
        %v832 = vadd.f32 %v758, %v815
        %v833 = vadd.f32 %v759, %v818
        %v834 = vadd.f32 %v760, %v821
        %v835 = vadd.f32 %v761, %v824
        %v836 = vadd.f32 %v762, %v827
        %v837 = vld [vmem:[%s2] sm:$0x1]
        %v839 = vperm.slane %v837, 0
        %v841 = vadd.f32 %v829, %v839
        %v842 = vadd.f32 %v830, %v839
        %v843 = vadd.f32 %v831, %v839
        %v844 = vadd.f32 %v832, %v839
        %v845 = vadd.f32 %v833, %v839
        %v846 = vadd.f32 %v834, %v839
        %v847 = vadd.f32 %v835, %v839
        %v848 = vadd.f32 %v836, %v839
        %849 = vst [vmem:[%s180] sm:$0xff] %v841
        %850 = vst [vmem:[%s180 + $0x8] sm:$0xff] %v842
        %851 = vst [vmem:[%s180 + $0x10] sm:$0xff] %v843
        %852 = vst [vmem:[%s180 + $0x18] sm:$0xff] %v844
        %853 = vst [vmem:[%s180 + $0x20] sm:$0xff] %v845
        %854 = vst [vmem:[%s180 + $0x28] sm:$0xff] %v846
        %855 = vst [vmem:[%s180 + $0x30] sm:$0xff] %v847
        %856 = vst [vmem:[%s180 + $0x38] sm:$0xff] %v848
        %s857 = sand.u32 %s94, 1
        %s858 = scalar_lea.sflag [#allocation4], %s857
        %s859 = sand.u32 %s94, 1
        %s860 = smul.addr %s859, 64
        %s861 = scalar_lea.vmem [#allocation5], %s860
        // Predicated region
        $region37: #{_lambda_.1} parent=31 // pred_check
          %p862 = pneg %p104
        $region38: #{_lambda_.1} parent=31 // pred_check_branch
          %864 = sbr.rel (%p862) target = $region40
        $region39: #{_lambda_.1} parent=31 // pred_region
          %866 = vsyncadd %s858, 0
          %s867 = smul.addr %s18, 8
          %s868 = smul.addr %s867, 8
          %s869 = scalar_lea.hbm %s3, %s868
          %s870 = sshll.u32 %s861, 4
          %s871 = int_to_ptr.vmem [resolvable:$true] %s870
          %s872 = sshll.u32 %s869, 4
          %s873 = int_to_ptr.hbm [resolvable:$true] %s872
          %878 = dma.vmem_to_hbm [thread:$0]  %s871, 1024, %s873, %s858, 128, 128, 8
        $region40: #{_lambda_.1} parent=31 // pred_fallthru
          _
      $region32: #{_lambda_.1} parent=5 // pred_fallthru
        _
      %p879 = scmp.le.s32.totalorder 2, %s13
      // Predicated region
      $region41: #{_lambda_.1} parent=5 // pred_check
        %p880 = pneg %p879
      $region42: #{_lambda_.1} parent=5 // pred_check_branch
        %882 = sbr.rel (%p880) target = $region44
      $region43: #{_lambda_.1} parent=5 // pred_region
        %s883 = ssub.s32 %s13, 2
        // Predicated region
        $region45: #{_lambda_.1} parent=43 // pred_check
          %p884 = pneg %p110
        $region46: #{_lambda_.1} parent=43 // pred_check_branch
          %886 = sbr.rel (%p884) target = $region48
        $region47: #{_lambda_.1} parent=43 // pred_region
          %s887 = sand.u32 %s95, 1
          %s888 = scalar_lea.sflag [#allocation4], %s887
          %s889 = sand.u32 %s95, 1
          %s890 = smul.addr %s889, 64
          %s891 = scalar_lea.vmem [#allocation5], %s890
          %893 = dma.done %s888, 1024
        $region48: #{_lambda_.1} parent=43 // pred_fallthru
          _
      $region44: #{_lambda_.1} parent=5 // pred_fallthru
        _
    $region6: #{_lambda_.1} parent=1 // loop_footer
      %s17 = sadd.s32 1, %s13
    $region7: #{_lambda_.1} parent=1 // loop_footer_branch
      %12 = sbr.rel target = $region3
    $region8: #{_lambda_.1} parent=1 // loop_exit
      _
    %894 = vsyncpa [#allocation3], 1
    %s895 = scalar_lea.sflag [#allocation3], 1
    %896 = vsyncpa %s895, 1
    %897 = vsyncpa [#allocation4], 1
    %s898 = scalar_lea.sflag [#allocation4], 1
    %899 = vsyncpa %s898, 1

</llo_original>
